<compile_context>
chip_gen: v5e
topology: v5e:2x2
jax: 0.10.0
libtpu: 0.0.40
codegen_flags: <defaults>
</compile_context>

<pallas_src>
import math

import jax
import jax.numpy as jnp
from jax.experimental import pallas as pl
from jax.experimental.pallas import tpu as pltpu

_LANE_CANDIDATES = (8192, 4096, 2048, 1024, 512, 256, 128)
_MIN_DMA_CHUNK_BYTES = 1 << 20   # target >= ~1 MiB per DMA chunk
_MAX_DMA_CHUNKS = 8              # keep the number of in-flight DMAs small


def _sublane_min(dtype) -> int:
    # Rows per fully packed vreg: 8 for 32-bit, 16 for bf16/fp16, 32 for 8-bit.
    itemsize = max(1, jnp.dtype(dtype).itemsize)
    return max(8, 32 // itemsize)


def _vmem_path_ok(dtype) -> bool:
    # Restrict the VMEM-staged path to plain 1/2/4-byte numeric dtypes; every
    # other dtype (bool, 4-bit, ...) goes through the layout-agnostic DMA path.
    d = jnp.dtype(dtype)
    return d.kind in ("f", "i", "u") and d.itemsize in (1, 2, 4)


def _auto_block_bytes() -> int:
    """Per-generation VMEM block size for the 'vmem' path."""
    try:
        kind = jax.devices()[0].device_kind.lower()
    except Exception:
        return 2 << 20
    if "7" in kind:                          # v7x: 3.2 TB/s HBM, bigger blocks
        return 8 << 20
    if "v6" in kind or "trillium" in kind:   # v6e: fits 32 MiB scoped default
        return 4 << 20
    return 2 << 20                           # v5e & unknown: safe everywhere


# ---------------------------------------------------------------------------
# Direct HBM -> HBM DMA path (default)
# ---------------------------------------------------------------------------

def _plan_dma_chunks(shape, dtype):
    """Static (start, size) chunks along axis 0; () means one whole-ref DMA."""
    if len(shape) < 2:
        return ()
    d0 = shape[0]
    itemsize = max(1, jnp.dtype(dtype).itemsize)
    total_bytes = math.prod(shape) * itemsize
    if d0 < 2 or total_bytes < 2 * _MIN_DMA_CHUNK_BYTES:
        return ()
    k = min(_MAX_DMA_CHUNKS, d0, max(2, total_bytes // _MIN_DMA_CHUNK_BYTES))
    # For 2-D arrays axis 0 is the second-minor (sublane-tiled) dim in the HBM
    # layout: keep chunk boundaries on sublane multiples.  For >=3-D arrays
    # axis 0 is a major dim and any boundary is fine.
    align = _sublane_min(dtype) if len(shape) == 2 else 1
    base = max(1, d0 // k)
    if align > 1:
        base = max(align, (base // align) * align)
    chunks, start = [], 0
    while start < d0 and len(chunks) < k - 1:
        size = min(base, d0 - start)
        chunks.append((start, size))
        start += size
    if start < d0:
        chunks.append((start, d0 - start))
    return tuple(chunks)


def _dma_copy(x: jax.Array) -> jax.Array:
    chunks = _plan_dma_chunks(x.shape, x.dtype)
    n_sems = max(1, len(chunks))

    def kernel(x_ref, o_ref, sems):
        if not chunks:
            cp = pltpu.make_async_copy(x_ref, o_ref, sems.at[0])
            cp.start()
            cp.wait()
        else:
            copies = []
            for i, (start, size) in enumerate(chunks):
                cp = pltpu.make_async_copy(
                    x_ref.at[pl.ds(start, size)],
                    o_ref.at[pl.ds(start, size)],
                    sems.at[i],
                )
                cp.start()
                copies.append(cp)
            for cp in copies:
                cp.wait()

    return pl.pallas_call(
        kernel,
        out_shape=jax.ShapeDtypeStruct(x.shape, x.dtype),
        in_specs=[pl.BlockSpec(memory_space=pl.ANY)],
        out_specs=pl.BlockSpec(memory_space=pl.ANY),
        scratch_shapes=[pltpu.SemaphoreType.DMA((n_sems,))],
    )(x)


def _identity_dma(x: jax.Array) -> jax.Array:
    total = math.prod(x.shape) if x.shape else 1
    if total == 0:
        return x  # nothing to copy
    if x.ndim == 0:
        return _dma_copy(x.reshape(1)).reshape(())
    return _dma_copy(x)


# ---------------------------------------------------------------------------
# VMEM-staged BlockSpec pipeline path (method="vmem")
# ---------------------------------------------------------------------------

def _identity_kernel(x_ref, o_ref):
    # Pure elementwise copy of the current VMEM tile.
    o_ref[...] = x_ref[...]


def _copy_vmem_2d(x2d: jax.Array, block_bytes: int) -> jax.Array:
    """Lane-dense, row-tiled Pallas copy of a TPU-friendly 2D array."""
    R, C = x2d.shape
    itemsize = jnp.dtype(x2d.dtype).itemsize
    sublane = _sublane_min(x2d.dtype)
    row_bytes = C * itemsize

    # Caller guarantees R % sublane == 0 and C % 128 == 0.
    r_units = R // sublane
    d_max = max(1, (block_bytes // row_bytes) // sublane)
    tr = min(d_max, r_units) * sublane          # never degrades to (8, C)
    grid = (pl.cdiv(R, tr),)                    # ragged last block is masked
    block = (tr, C)

    params = {"dimension_semantics": ("parallel",)}
    tile_bytes = tr * C * itemsize
    # 2 operands x 2 pipeline buffers; raise scoped VMEM only when needed
    # (keeps v5e's 16 MiB default working, stays well under v7x's 64 MiB).
    if 4 * tile_bytes > 12 * (1 << 20):
        params["vmem_limit_bytes"] = min(4 * tile_bytes + (8 << 20), 56 << 20)

    return pl.pallas_call(
        _identity_kernel,
        out_shape=jax.ShapeDtypeStruct((R, C), x2d.dtype),
        grid_spec=pltpu.PrefetchScalarGridSpec(
            num_scalar_prefetch=0,
            grid=grid,
            in_specs=[pl.BlockSpec(block, lambda i: (i, 0))],
            out_specs=pl.BlockSpec(block, lambda i: (i, 0)),
        ),
        compiler_params=pltpu.CompilerParams(**params),
    )(x2d)


def _identity_vmem(x: jax.Array, block_bytes=None) -> jax.Array:
    total = math.prod(x.shape) if x.shape else 1
    if total == 0:
        return x
    if not _vmem_path_ok(x.dtype):
        return _identity_dma(x)

    bb = _auto_block_bytes() if block_bytes is None else int(block_bytes)
    bb = min(max(bb, 1), 8 << 20)

    sublane = _sublane_min(x.dtype)
    flat = x.reshape(-1)
    # Lane-dense (rows, LANE) view with sublane-aligned rows -> unmasked vst.
    for lane in _LANE_CANDIDATES:
        if total % (lane * sublane) == 0:
            return _copy_vmem_2d(flat.reshape(-1, lane), bb).reshape(x.shape)

    # No lane-dense view: the HBM->HBM DMA copy needs no alignment or padding.
    return _identity_dma(x)


# ---------------------------------------------------------------------------
# Public entry point (matches nn.Identity.forward)
# ---------------------------------------------------------------------------

def identity(x: jax.Array, *, force_kernel: bool = False,
             method: str = "dma", block_bytes=None) -> jax.Array:
    """Forward pass of nn.Identity.

    By default returns `x` unchanged (the optimal implementation: no kernel,
    no HBM traffic - exactly the PyTorch semantics).  Set `force_kernel=True`
    to materialize a fresh copy via a Pallas TPU kernel:
      method="dma"  : direct chunked HBM->HBM DMA copy (default, any shape).
      method="vmem" : lane-dense BlockSpec VMEM pipeline (block_bytes tunable).
    """
    if not force_kernel:
        return x
    if method == "vmem":
        return _identity_vmem(x, block_bytes=block_bytes)
    return _identity_dma(x)


if __name__ == "__main__":
    key = jax.random.PRNGKey(0)
    # Small NCHW input consistent with a typical conv-net feature map.
    x = jax.random.normal(key, (2, 4, 16, 16), dtype=jnp.float32)

    # Fast path: identity is free, returns the same array.
    assert identity(x) is x

    def check(a, method, **kw):
        y = identity(a, force_kernel=True, method=method, **kw)
        jax.block_until_ready(y)
        assert y.shape == a.shape, (method, y.shape, a.shape)
        assert y.dtype == a.dtype, (method, y.dtype, a.dtype)
        assert bool(jnp.all(y == a)), ("identity mismatch", method, a.shape)

    # Primary input through both kernel paths.
    check(x, "dma")
    check(x, "vmem")

    k1, k2, k3 = jax.random.split(key, 3)
    x_odd = jax.random.normal(k1, (3, 5, 7), dtype=jnp.float32)        # unaligned
    x_bf = jax.random.normal(k2, (2, 8, 32), dtype=jnp.bfloat16)       # 16-bit dtype
    x_rag = jax.random.normal(k3, (13, 64, 64), dtype=jnp.float32)     # ragged tiles
    x_big = jax.random.normal(key, (16, 256, 256), dtype=jnp.float32)  # 4 MiB, chunked

    check(x_odd, "dma")            # whole-ref HBM->HBM DMA, no padding
    check(x_odd, "vmem")           # not lane-dense -> routed to the DMA path
    check(x_bf, "dma")
    check(x_rag, "dma")
    check(x_rag, "vmem", block_bytes=32 * 1024)  # forces a ragged last block
    check(x_big, "dma")            # multiple DMA chunks in flight
    check(x_big, "vmem")

    print("KERNEL_OK")
</pallas_src>

<mosaic_0001>
module attributes {stable_mosaic.version = 11 : i64} {
  func.func @kernel(%arg0: memref<2x4x16x16xf32, #tpu.memory_space<any>>, %arg1: memref<2x4x16x16xf32, #tpu.memory_space<any>>, %arg2: memref<1x!tpu.dma_semaphore, #tpu.memory_space<semaphore_mem>>) attributes {dimension_semantics = [], scalar_prefetch = 0 : i64, scratch_operands = 1 : i64, tpu.core_type = #tpu.core_type<tc>} {
    %c0_i32 = arith.constant 0 : i32
    %0 = tpu.memref_slice %arg2[%c0_i32] : memref<1x!tpu.dma_semaphore, #tpu.memory_space<semaphore_mem>> -> memref<1x!tpu.dma_semaphore, #tpu.memory_space<semaphore_mem>>
    %1 = tpu.memref_squeeze %0 : memref<1x!tpu.dma_semaphore, #tpu.memory_space<semaphore_mem>> -> memref<!tpu.dma_semaphore, #tpu.memory_space<semaphore_mem>>
    tpu.enqueue_dma source(%arg0 : memref<2x4x16x16xf32, #tpu.memory_space<any>>) target(%arg1 : memref<2x4x16x16xf32, #tpu.memory_space<any>>) target_semaphore(%1 : memref<!tpu.dma_semaphore, #tpu.memory_space<semaphore_mem>>)
    %c0_i32_0 = arith.constant 0 : i32
    %2 = tpu.memref_slice %arg2[%c0_i32_0] : memref<1x!tpu.dma_semaphore, #tpu.memory_space<semaphore_mem>> -> memref<1x!tpu.dma_semaphore, #tpu.memory_space<semaphore_mem>>
    %3 = tpu.memref_squeeze %2 : memref<1x!tpu.dma_semaphore, #tpu.memory_space<semaphore_mem>> -> memref<!tpu.dma_semaphore, #tpu.memory_space<semaphore_mem>>
    tpu.wait_dma2 semaphore(%3 : memref<!tpu.dma_semaphore, #tpu.memory_space<semaphore_mem>>) src(%arg0 : memref<2x4x16x16xf32, #tpu.memory_space<any>>) dst(%arg1 : memref<2x4x16x16xf32, #tpu.memory_space<any>>)
    return
  }
}

</mosaic_0001>

<llo_original>
// kernel: tpu_custom_call.1
$region0: #{tpu_custom_call.1}
  #allocation0 [shape = 'u32[]', space=smem, size = 0x4, offset = 0x4, fixed_abs, tag = 'smem constant byte address 0x4 - core index']
  #allocation1 [shape = 'u32[72,128]{1,0:T(1,128)}', space=vmem, size = 0x9000, scoped, tag = 'internal scratch']
  #allocation2 [shape = 's32[1]{0}', space=sflag, size = 0x4, scoped, tag = 'scratch operand']
  #allocation3 [shape = 's32[]', space=sflag, size = 0x4, offset = 0, fixed_abs, tag = 'sflag constant byte address 0x0 - dummy sync flag']
  #allocation4 [shape = 'u32[0]{0}', space=smem, size = 0, offset = 0, fixed_abs, tag = 'smem constant byte address 0x0 - null']
  %s0 = inlined_call_operand.hbm [shape: f32[2,4,16,16], index: 0, kind: input, shape index: {}]
  %s1 = inlined_call_operand.hbm [shape: f32[2,4,16,16], index: 1, kind: output, shape index: {}]
  %s2 = sld [smem:[#allocation0]]
  $region2: #{tpu_custom_call.1} parent=0
    _
  %s4 = ssub.s32 1, %s2
  %s5 = scalar_select 0, %s4, %s2
  %s7 = sshll.u32 1, 14
  %s8 = sxor.u32 4294967295, %s7
  %s10 = sshll.u32 %s0, 4
  %s11 = int_to_ptr.hbm [resolvable:$true] %s10
  %s12 = sshll.u32 %s1, 4
  %s13 = int_to_ptr.hbm [resolvable:$true] %s12
  %16 = dma.general %s11, 2048, %s13, [#allocation2], [#allocation3], [#allocation4], 0, 0
  %s17 = smul.u32 2, 4
  %s18 = smul.u32 %s17, 16
  %s19 = smul.u32 %s18, 1
  %s20 = sshll.u32 %s19, 4
  %21 = dma.done [#allocation2], %s20
  %22 = vsyncmov [#allocation2]
  %s23 = vpop.sfrf %22
  %p24 = scmp.eq.s32.totalorder %s23, 0
  %p25 = pneg %p24
  %27 = shalt.err (%p25)

</llo_original>
